<compile_context>
chip_gen: v7x
topology: tpu7x:2x2x1
jax: 0.10.0
libtpu: 0.0.40
codegen_flags: <defaults>
</compile_context>

<pallas_src>
import jax
import jax.numpy as jnp
from jax.experimental import pallas as pl
from jax.experimental.pallas import tpu as pltpu


def _round_up(n, m):
    return ((n + m - 1) // m) * m


def vnet_kernel(x_ref, w1_ref, b1_ref, w2_ref, b2_ref, o_ref):
    """One batch tile: x_ref (4, TB) -> o_ref (1, TB)."""
    x = x_ref[...]                                            # (4, TB)  f32
    # fc1 on the MXU: (10, 4) @ (4, TB) -> (10, TB); bias broadcasts over lanes.
    # (Could be 40 broadcast VPU FMAs instead, but the MXU path is hidden while
    #  the kernel is HBM-bound, so keep the simpler form.)
    h = jnp.dot(w1_ref[...], x, preferred_element_type=jnp.float32) + b1_ref[...]
    h = jnp.maximum(h, 0.0)                                   # ReLU (VPU)
    # fc2 as a VPU multiply + sublane (XLU) reduction, no N=1 MXU matmul:
    #   (10, TB) * (10, 1) -> sum over features -> (1, TB)
    o = jnp.sum(h * w2_ref[...], axis=0, keepdims=True) + b2_ref[0, 0]
    o_ref[...] = o.astype(o_ref.dtype)


# Tile policy: each grid step should move ~1-4 MiB of x (16 B per batch row),
# while keeping several grid steps alive for megacore sharding / pipelining.
_TB_TARGET = 131072      # ~2 MiB of x per grid step
_MIN_STEPS = 8           # keep the parallel axis shardable across 2 TCs (v7x)


def vnet_forward(x, w1, b1, w2, b2, *, tb=None, x_is_feature_major=False):
    """x: (B, 4) f32 (PyTorch layout) or (4, B) if x_is_feature_major=True.
       Params in PyTorch layout: w1 (10, 4), b1 (10,), w2 (1, 10), b2 (1,).
       Returns (B, 1) f32."""
    if x_is_feature_major:
        xT = x.astype(jnp.float32)            # already (4, B): no layout pass
    else:
        # Single batch-on-lanes layout pass (producers should prefer emitting
        # x feature-major to avoid it entirely). No full-array pad is done.
        xT = x.astype(jnp.float32).T          # (B, 4) -> (4, B)
    B = xT.shape[1]

    # Pick the batch tile: big (amortize per-step cost), multiple of 128,
    # but capped so we keep >= _MIN_STEPS grid steps when B allows it.
    if tb is None:
        tb = min(_TB_TARGET, _round_up(pl.cdiv(B, _MIN_STEPS), 128))
    tb = max(128, _round_up(tb, 128))

    grid = (pl.cdiv(B, tb),)                  # partial final block, no pad

    # Pre-orient parameters once (tiny, no in-kernel transposes).
    w1m = w1.astype(jnp.float32)                 # (10, 4)  W1 for W1 @ x
    b1c = b1.reshape(10, 1).astype(jnp.float32)  # (10, 1)  broadcasts over lanes
    w2c = w2.reshape(10, 1).astype(jnp.float32)  # (10, 1)  column for reduction
    b2s = b2.reshape(1, 1).astype(jnp.float32)   # (1, 1)   scalar, lives in SMEM

    # VMEM budget: x tile 16*tb (double-buffered) + out tile 4*tb (double-
    # buffered) + weights/headroom. Clamped to stay safe on v7x's 64 MiB VMEM
    # while still above v5e's 16 MiB scoped default.
    vmem_bytes = int(max(16 << 20, min(48 * tb + (4 << 20), 48 << 20)))

    out = pl.pallas_call(
        vnet_kernel,
        out_shape=jax.ShapeDtypeStruct((1, B), jnp.float32),
        grid_spec=pltpu.PrefetchScalarGridSpec(
            num_scalar_prefetch=0,
            grid=grid,
            in_specs=[
                pl.BlockSpec((4, tb), lambda i: (0, i)),    # x tile (batch on lanes)
                pl.BlockSpec((10, 4), lambda i: (0, 0)),    # W1 (resident)
                pl.BlockSpec((10, 1), lambda i: (0, 0)),    # b1 (resident)
                pl.BlockSpec((10, 1), lambda i: (0, 0)),    # w2 column (resident)
                pl.BlockSpec((1, 1), lambda i: (0, 0),
                             memory_space=pltpu.MemorySpace.SMEM),  # b2 scalar
            ],
            out_specs=pl.BlockSpec((1, tb), lambda i: (0, i)),
        ),
        compiler_params=pltpu.CompilerParams(
            dimension_semantics=("parallel",),   # megacore sharding on v7x
            vmem_limit_bytes=vmem_bytes,
        ),
    )(xT, w1m, b1c, w2c, b2s)

    # (1, B) -> (B, 1): same contiguous data, no extra HBM pass.
    return out.reshape(B, 1)


def init_params(key):
    """Deterministic init mimicking PyTorch nn.Linear default U(-1/sqrt(fan_in), +)."""
    k1, k2, k3, k4 = jax.random.split(key, 4)
    bound1 = 1.0 / jnp.sqrt(4.0)
    bound2 = 1.0 / jnp.sqrt(10.0)
    w1 = jax.random.uniform(k1, (10, 4), jnp.float32, -bound1, bound1)   # fc1.weight
    b1 = jax.random.uniform(k2, (10,), jnp.float32, -bound1, bound1)     # fc1.bias
    w2 = jax.random.uniform(k3, (1, 10), jnp.float32, -bound2, bound2)   # fc2.weight
    b2 = jax.random.uniform(k4, (1,), jnp.float32, -bound2, bound2)      # fc2.bias
    return w1, b1, w2, b2


def _reference(x, w1, b1, w2, b2):
    """Plain-JAX forward, same math as the PyTorch module."""
    return jnp.maximum(x @ w1.T + b1, 0.0) @ w2.T + b2


if __name__ == "__main__":
    key = jax.random.PRNGKey(0)
    k_params, k_x1, k_x2 = jax.random.split(key, 3)
    w1, b1, w2, b2 = init_params(k_params)

    # Small batch: single (partial) tile.
    B1 = 8
    x1 = jax.random.normal(k_x1, (B1, 4), jnp.float32)
    out1 = jax.block_until_ready(vnet_forward(x1, w1, b1, w2, b2))
    ref1 = _reference(x1, w1, b1, w2, b2)
    assert out1.shape == (B1, 1)
    assert jnp.allclose(out1, ref1, atol=1e-5, rtol=1e-5)

    # Non-multiple-of-tile batch: multi-step grid with a partial final block
    # (no full-array pad anymore).
    B2 = 300
    x2 = jax.random.normal(k_x2, (B2, 4), jnp.float32)
    out2 = jax.block_until_ready(vnet_forward(x2, w1, b1, w2, b2, tb=128))
    ref2 = _reference(x2, w1, b1, w2, b2)
    assert out2.shape == (B2, 1)
    assert jnp.allclose(out2, ref2, atol=1e-5, rtol=1e-5)

    # Feature-major producer path: skips the wrapper transpose pass entirely.
    out3 = jax.block_until_ready(
        vnet_forward(x2.T, w1, b1, w2, b2, x_is_feature_major=True))
    assert out3.shape == (B2, 1)
    assert jnp.allclose(out3, ref2, atol=1e-5, rtol=1e-5)

    print("KERNEL_OK")
</pallas_src>

<mosaic_0001>
module attributes {stable_mosaic.version = 11 : i64} {
  func.func @vnet_kernel(%arg0: i32, %arg1: memref<4x128xf32, #tpu.memory_space<vmem>>, %arg2: memref<10x4xf32, #tpu.memory_space<vmem>>, %arg3: memref<10x1xf32, #tpu.memory_space<vmem>>, %arg4: memref<10x1xf32, #tpu.memory_space<vmem>>, %arg5: memref<1x1xf32, #tpu.memory_space<smem>>, %arg6: memref<1x128xf32, #tpu.memory_space<vmem>>) attributes {dimension_semantics = [#tpu.dimension_semantics<parallel>], iteration_bounds = array<i64: 1>, scalar_prefetch = 0 : i64, scratch_operands = 0 : i64, tpu.core_type = #tpu.core_type<tc>, window_params = [{transform_indices = @transform_0, window_bounds = array<i64: 4, 128>}, {pipeline_mode = #tpu.pipeline_mode<synchronous>, transform_indices = @transform_1, window_bounds = array<i64: 10, 4>}, {pipeline_mode = #tpu.pipeline_mode<synchronous>, transform_indices = @transform_2, window_bounds = array<i64: 10, 1>}, {pipeline_mode = #tpu.pipeline_mode<synchronous>, transform_indices = @transform_3, window_bounds = array<i64: 10, 1>}, {transform_indices = @transform_4, window_bounds = array<i64: 1, 1>}, {transform_indices = @transform_5, window_bounds = array<i64: 1, 128>}]} {
    %c0 = arith.constant 0 : index
    %c0_0 = arith.constant 0 : index
    %0 = vector.load %arg1[%c0, %c0_0] : memref<4x128xf32, #tpu.memory_space<vmem>>, vector<4x128xf32>
    %c0_1 = arith.constant 0 : index
    %c0_2 = arith.constant 0 : index
    %1 = vector.load %arg2[%c0_1, %c0_2] : memref<10x4xf32, #tpu.memory_space<vmem>>, vector<10x4xf32>
    %cst = arith.constant dense<0.000000e+00> : vector<10x128xf32>
    %2 = tpu.matmul %1, %0, %cst {dimension_numbers = #tpu.dot_dimension_numbers<[1], [0], [0], [1], [0, 0, 1, 1], [], []>} : vector<10x4xf32>, vector<4x128xf32>, vector<10x128xf32> -> vector<10x128xf32>
    %c0_3 = arith.constant 0 : index
    %c0_4 = arith.constant 0 : index
    %3 = vector.load %arg3[%c0_3, %c0_4] : memref<10x1xf32, #tpu.memory_space<vmem>>, vector<10x1xf32>
    %4 = vector.broadcast %3 : vector<10x1xf32> to vector<10x128xf32>
    %5 = arith.addf %2, %4 : vector<10x128xf32>
    %cst_5 = arith.constant 0.000000e+00 : f32
    %6 = vector.broadcast %cst_5 : f32 to vector<10x128xf32>
    %7 = arith.maximumf %5, %6 : vector<10x128xf32>
    %c0_6 = arith.constant 0 : index
    %c0_7 = arith.constant 0 : index
    %8 = vector.load %arg4[%c0_6, %c0_7] : memref<10x1xf32, #tpu.memory_space<vmem>>, vector<10x1xf32>
    %9 = vector.broadcast %8 : vector<10x1xf32> to vector<10x128xf32>
    %10 = arith.mulf %7, %9 : vector<10x128xf32>
    %cst_8 = arith.constant dense<0.000000e+00> : vector<128xf32>
    %11 = vector.multi_reduction <add>, %10, %cst_8 [0] : vector<10x128xf32> to vector<128xf32>
    %12 = vector.shape_cast %11 : vector<128xf32> to vector<1x128xf32>
    %c0_9 = arith.constant 0 : index
    %c0_10 = arith.constant 0 : index
    %13 = memref.load %arg5[%c0_9, %c0_10] : memref<1x1xf32, #tpu.memory_space<smem>>
    %14 = vector.broadcast %13 : f32 to vector<1x128xf32>
    %15 = arith.addf %12, %14 : vector<1x128xf32>
    %c0_11 = arith.constant 0 : index
    %c0_12 = arith.constant 0 : index
    %16 = vector.load %arg6[%c0_11, %c0_12] : memref<1x128xf32, #tpu.memory_space<vmem>>, vector<1x128xf32>
    tpu.vector_store %arg6[%c0_11, %c0_12], %15 {strides = array<i32>} : memref<1x128xf32, #tpu.memory_space<vmem>>, vector<1x128xf32>,
    return
  }
  func.func @transform_0(%arg0: i32) -> (i32, i32) {
    %c0_i32 = arith.constant 0 : i32
    %c0_i32_0 = arith.constant 0 : i32
    return %c0_i32, %arg0 : i32, i32
  }
  func.func @transform_1(%arg0: i32) -> (i32, i32) {
    %c0_i32 = arith.constant 0 : i32
    %c0_i32_0 = arith.constant 0 : i32
    %c0_i32_1 = arith.constant 0 : i32
    return %c0_i32, %c0_i32_0 : i32, i32
  }
  func.func @transform_2(%arg0: i32) -> (i32, i32) {
    %c0_i32 = arith.constant 0 : i32
    %c0_i32_0 = arith.constant 0 : i32
    %c0_i32_1 = arith.constant 0 : i32
    return %c0_i32, %c0_i32_0 : i32, i32
  }
  func.func @transform_3(%arg0: i32) -> (i32, i32) {
    %c0_i32 = arith.constant 0 : i32
    %c0_i32_0 = arith.constant 0 : i32
    %c0_i32_1 = arith.constant 0 : i32
    return %c0_i32, %c0_i32_0 : i32, i32
  }
  func.func @transform_4(%arg0: i32) -> (i32, i32) {
    %c0_i32 = arith.constant 0 : i32
    %c0_i32_0 = arith.constant 0 : i32
    %c0_i32_1 = arith.constant 0 : i32
    return %c0_i32, %c0_i32_0 : i32, i32
  }
  func.func @transform_5(%arg0: i32) -> (i32, i32) {
    %c0_i32 = arith.constant 0 : i32
    %c0_i32_0 = arith.constant 0 : i32
    return %c0_i32, %arg0 : i32, i32
  }
}

</mosaic_0001>

<llo_original>
// kernel: tpu_custom_call.1
$region0: #{tpu_custom_call.1}
  #allocation0 [shape = 'u32[]', space=smem, size = 0x4, offset = 0x4, fixed_abs, tag = 'smem constant byte address 0x4 - core index']
  #allocation1 [shape = 'u32[144,128]{1,0:T(1,128)}', space=vmem, size = 0x12000, scoped, tag = 'internal scratch']
  #allocation2 [shape = 'f32[1,1]{1,0:T(1,128)S(6)}', space=smem, size = 0x200, scoped, tag = 'scoped memory for tpu_custom_call.1']
  %s0 = inlined_call_operand.vmem [shape: f32[4,8], index: 0, kind: input, shape index: {}]
  %s1 = inlined_call_operand.vmem [shape: f32[10,4], index: 1, kind: input, shape index: {}]
  %s2 = inlined_call_operand.vmem [shape: f32[10,1], index: 2, kind: input, shape index: {}]
  %s3 = inlined_call_operand.vmem [shape: f32[10,1], index: 3, kind: input, shape index: {}]
  %s4 = inlined_call_operand.<no memory space> [shape: f32[1,1], index: 4, kind: input, shape index: {}]
  %s5 = inlined_call_operand.hbm [shape: f32[1,8], index: 5, kind: output, shape index: {}]
  %s6 = sld [smem:[#allocation0]]
  $region30: #{tpu_custom_call.1} parent=0
    _
  %s8 = ssub.s32 1, %s6
  %s9 = scalar_select 0, %s8, %s6
  %10 = sst [smem:[#allocation2]] %s4
  $region1: #{tpu_custom_call.1} parent=0
    #allocation3 [shape = 'u8[512]{0}', space=vmem, size = 0x400, scoped, tag = 'output window, operand 0, single buffered']
    #allocation4 [shape = 's32[1]{0}', space=sflag, size = 0x4, scoped, tag = 'scoped memory for tpu_custom_call.1']
    %11 = vsyncpa [#allocation4], 0
    // Predicated region
    $region2: #{tpu_custom_call.1} parent=1 // pred_check
      _
    $region3: #{tpu_custom_call.1} parent=1 // pred_check_branch
      %13 = sbr.rel (0) target = $region5
    $region4: #{tpu_custom_call.1} parent=1 // pred_region
      _
    $region5: #{tpu_custom_call.1} parent=1 // pred_fallthru
      _
    // Predicated region
    $region6: #{tpu_custom_call.1} parent=1 // pred_check
      _
    $region7: #{tpu_custom_call.1} parent=1 // pred_check_branch
      %15 = sbr.rel (0) target = $region9
    $region8: #{tpu_custom_call.1} parent=1 // pred_region
      _
    $region9: #{tpu_custom_call.1} parent=1 // pred_fallthru
      _
    // Predicated region
    $region10: #{tpu_custom_call.1} parent=1 // pred_check
      _
    $region11: #{tpu_custom_call.1} parent=1 // pred_check_branch
      %17 = sbr.rel (0) target = $region13
    $region12: #{tpu_custom_call.1} parent=1 // pred_region
      _
    $region13: #{tpu_custom_call.1} parent=1 // pred_fallthru
      _
    // Predicated region
    $region14: #{tpu_custom_call.1} parent=1 // pred_check
      _
    $region15: #{tpu_custom_call.1} parent=1 // pred_check_branch
      %19 = sbr.rel (0) target = $region17
    $region16: #{tpu_custom_call.1} parent=1 // pred_region
      _
    $region17: #{tpu_custom_call.1} parent=1 // pred_fallthru
      _
    // Predicated region
    $region18: #{tpu_custom_call.1} parent=1 // pred_check
      _
    $region19: #{tpu_custom_call.1} parent=1 // pred_check_branch
      %21 = sbr.rel (0) target = $region21
    $region20: #{tpu_custom_call.1} parent=1 // pred_region
      _
    $region21: #{tpu_custom_call.1} parent=1 // pred_fallthru
      _
    %v22 = vld [vmem:[%s0] sm:$0xf]
    %v23 = vld [vmem:[%s1] sm:$0xff]
    %v24 = vld [vmem:[%s1 + $0x8] sm:$0x3]
    %v25 = vld [vmem:[%s2] sm:$0xff]
    %v26 = vld [vmem:[%s2 + $0x8] sm:$0x3]
    %28 = vset.pattern.permute.xlu0 0
    %29 = vperm.xlu0 %28, %v25
    %v30 = vpop.permute.xlu0 %29
    %33 = vset.pattern.permute.xlu0 0
    %34 = vperm.xlu0 %33, %v26
    %v35 = vpop.permute.xlu0 %34
    %vm37 = vcmask 31744
    %v39 = vsel %vm37, %v23, 0
    %v42 = vsel %vm37, %v24, 0
    %vm44 = vcmask 1043456
    %v46 = vsel %vm44, %v22, 0
    %48 = vmatprep.subr.mxu0 0.0
    %49 = vmatpush1.msra.mxu0 %v46
    %50 = vmatprep.subr.mxu0 0.0
    %51 = vmatpush1.msra.mxu0 0.0
    %52 = vmatprep.subr.mxu0 0.0
    %53 = vmatpush1.msra.mxu0 0.0
    %54 = vmatprep.subr.mxu0 0.0
    %55 = vmatpush1.msra.mxu0 0.0
    %56 = vmatprep.subr.mxu0 0.0
    %57 = vmatpush1.msra.mxu0 0.0
    %58 = vmatprep.subr.mxu0 0.0
    %59 = vmatpush1.msra.mxu0 0.0
    %60 = vmatprep.subr.mxu0 0.0
    %61 = vmatpush1.msra.mxu0 0.0
    %62 = vmatprep.subr.mxu0 0.0
    %63 = vmatpush1.msra.mxu0 0.0
    %64 = vmatprep.subr.mxu0 0.0
    %65 = vmatpush1.msra.mxu0 0.0
    %66 = vmatprep.subr.mxu0 0.0
    %67 = vmatpush1.msra.mxu0 0.0
    %68 = vmatprep.subr.mxu0 0.0
    %69 = vmatpush1.msra.mxu0 0.0
    %70 = vmatprep.subr.mxu0 0.0
    %71 = vmatpush1.msra.mxu0 0.0
    %72 = vmatprep.subr.mxu0 0.0
    %73 = vmatpush1.msra.mxu0 0.0
    %74 = vmatprep.subr.mxu0 0.0
    %75 = vmatpush1.msra.mxu0 0.0
    %76 = vmatprep.subr.mxu0 0.0
    %77 = vmatpush1.msra.mxu0 0.0
    %78 = vmatprep.subr.mxu0 0.0
    %79 = vmatpush1.msra.mxu0 0.0
    %80 = vmatprep.subr.mxu0 0.0
    %81 = vmatpush1.msra.mxu0 0.0
    %82 = vmatprep.subr.mxu0 0.0
    %83 = vmatpush1.msra.mxu0 0.0
    %84 = vmatprep.subr.mxu0 0.0
    %85 = vmatpush1.msra.mxu0 0.0
    %86 = vmatprep.subr.mxu0 0.0
    %87 = vmatpush1.msra.mxu0 0.0
    %88 = vmatprep.subr.mxu0 0.0
    %89 = vmatpush1.msra.mxu0 0.0
    %90 = vmatprep.subr.mxu0 0.0
    %91 = vmatpush1.msra.mxu0 0.0
    %92 = vmatprep.subr.mxu0 0.0
    %93 = vmatpush1.msra.mxu0 0.0
    %94 = vmatprep.subr.mxu0 0.0
    %95 = vmatpush1.msra.mxu0 0.0
    %96 = vmatprep.subr.mxu0 0.0
    %97 = vmatpush1.msra.mxu0 0.0
    %98 = vmatprep.subr.mxu0 0.0
    %99 = vmatpush1.msra.mxu0 0.0
    %100 = vmatprep.subr.mxu0 0.0
    %101 = vmatpush1.msra.mxu0 0.0
    %102 = vmatprep.subr.mxu0 0.0
    %103 = vmatpush1.msra.mxu0 0.0
    %104 = vmatprep.subr.mxu0 0.0
    %105 = vmatpush1.msra.mxu0 0.0
    %106 = vmatprep.subr.mxu0 0.0
    %107 = vmatpush1.msra.mxu0 0.0
    %108 = vmatprep.subr.mxu0 0.0
    %109 = vmatpush1.msra.mxu0 0.0
    %110 = vmatprep.subr.mxu0 0.0
    %111 = vmatpush1.msra.mxu0 0.0
    %112 = vmatprep.mubr.f32.mxu0 0.0
    %113 = vmatmul.mubr.f32.gmra.mrb[0].mxu0 %v39
    %v114 = vpop.f32.mrb[0].mxu0
    %v115 = vadd.f32 %v30, %v114
    %v116 = vpop.f32.mrb[0].mxu0
    %117 = vmatprep.mubr.f32.mxu0 0.0
    %118 = vmatmul.mubr.f32.gmra.mrb[0].mxu0 %v42
    %v119 = vpop.f32.mrb[0].mxu0
    %v120 = vadd.f32 %v35, %v119
    %v121 = vpop.f32.mrb[0].mxu0
    %122 = vdwg.mxu0
    %v123 = vmax.f32 %v115, 0.0
    %v124 = vmax.f32 %v120, 0.0
    %v125 = vld [vmem:[%s3] sm:$0xff]
    %v126 = vld [vmem:[%s3 + $0x8] sm:$0x3]
    %128 = vset.pattern.permute.xlu0 0
    %129 = vperm.xlu0 %128, %v125
    %v130 = vpop.permute.xlu0 %129
    %133 = vset.pattern.permute.xlu0 0
    %134 = vperm.xlu0 %133, %v126
    %v135 = vpop.permute.xlu0 %134
    %v137 = vmul.f32 %v123, %v130
    %v138 = vmul.f32 %v124, %v135
    %vm139 = vcmask 1041408
    %v140 = vsel %vm139, %v138, 0.0
    %v141 = vadd.f32 %v137, %v140
    %v142 = vrot.slane %v141, 4
    %v143 = vadd.f32 %v141, %v142
    %v144 = vrot.slane %v143, 2
    %v145 = vadd.f32 %v143, %v144
    %v146 = vrot.slane %v145, 1
    %v147 = vadd.f32 %v145, %v146
    %s148 = sld [smem:[#allocation2]]
    %v149 = vstv %s148
    %v150 = vadd.f32 %v147, %v149
    %151 = vst [vmem:[#allocation3] sm:$0x1] %v150
    // Predicated region
    $region22: #{tpu_custom_call.1} parent=1 // pred_check
      _
    $region23: #{tpu_custom_call.1} parent=1 // pred_check_branch
      %153 = sbr.rel (0) target = $region25
    $region24: #{tpu_custom_call.1} parent=1 // pred_region
      %s155 = ssub.s32 16, 16
      %156 = vsyncadd [#allocation4], %s155
      %s158 = sshll.u32 [#allocation3], 4
      %s159 = int_to_ptr.vmem [resolvable:$true] %s158
      %161 = dma.vmem_to_hbm [thread:$0]  %s159, 16, %s5, [#allocation4]
    $region25: #{tpu_custom_call.1} parent=1 // pred_fallthru
      _
    // Predicated region
    $region26: #{tpu_custom_call.1} parent=1 // pred_check
      _
    $region27: #{tpu_custom_call.1} parent=1 // pred_check_branch
      %163 = sbr.rel (0) target = $region29
    $region28: #{tpu_custom_call.1} parent=1 // pred_region
      %164 = dma.done [#allocation4], 16
    $region29: #{tpu_custom_call.1} parent=1 // pred_fallthru
      _
    %165 = vsyncpa [#allocation4], 1

</llo_original>
